<compile_context>
chip_gen: v7x
topology: tpu7x:2x2x1
jax: 0.10.0
libtpu: 0.0.40
codegen_flags: <defaults>
</compile_context>

<pallas_src>
import functools

import jax
import jax.numpy as jnp
from jax import lax
from jax.experimental import pallas as pl
from jax.experimental.pallas import tpu as pltpu

NEG_SLOPE = 0.2
BN_EPS = 1e-5
NEG_BIG = -1e30
VMEM_LIMIT = 32 * 1024 * 1024     # explicit scoped-VMEM limit, valid on v5e/v6e/v7x


# ---------------------------------------------------------------------------
# Pass 1: full-batch BatchNorm statistics, folded into scale/shift.
# Input is packed (N/pack, C*pack) so every vreg uses all 128 lanes.
# ---------------------------------------------------------------------------
def _bn_scale_shift_kernel(xp_ref, gamma_ref, beta_ref, scale_ref, shift_ref,
                           sum_sc, sq_sc, *, n_total, pack, c):
    i = pl.program_id(0)

    @pl.when(i == 0)
    def _():
        sum_sc[...] = jnp.zeros_like(sum_sc)
        sq_sc[...] = jnp.zeros_like(sq_sc)

    xp = xp_ref[...]                                     # [Tp, C*pack]
    sum_sc[...] += jnp.sum(xp, axis=0, keepdims=True)
    sq_sc[...] += jnp.sum(xp * xp, axis=0, keepdims=True)

    @pl.when(i == pl.num_programs(0) - 1)
    def _():
        s_all = sum_sc[...]                              # [1, C*pack]
        q_all = sq_sc[...]
        s_tot = s_all[:, 0:c]
        q_tot = q_all[:, 0:c]
        for g in range(1, pack):                         # fold packed column groups
            s_tot = s_tot + s_all[:, g * c:(g + 1) * c]
            q_tot = q_tot + q_all[:, g * c:(g + 1) * c]
        inv_n = jnp.float32(1.0 / n_total)
        mean = s_tot * inv_n
        var = q_tot * inv_n - mean * mean                # biased (training-mode) variance
        rstd = lax.rsqrt(var + BN_EPS)
        scale = rstd * gamma_ref[...]                    # fold BN affine
        scale_ref[...] = scale
        shift_ref[...] = beta_ref[...] - mean * scale


# ---------------------------------------------------------------------------
# Pass 2: h = relu(x*scale + shift); feat = h @ Wfc; hoisted logits el/er.
# el is emitted transposed [H, N] (lane-dense over nodes) so the attention pass
# can broadcast it along the src lane axis without a transpose.
# ---------------------------------------------------------------------------
def _project_kernel(x_ref, scale_ref, shift_ref, wfc_ref, wlt_ref, wrt_ref,
                    feat_ref, el_ref, er_ref):
    h = jnp.maximum(x_ref[...] * scale_ref[...] + shift_ref[...], 0.0)   # [Tn, C]
    feat = jnp.dot(h, wfc_ref[...], preferred_element_type=jnp.float32)  # [Tn, HD]
    feat_ref[...] = feat

    contract_last = (((1,), (1,)), ((), ()))             # A . B^T (contract last dims)
    # el^T = W_l^T . feat^T  -> [H, Tn]  (W_lT is block-diagonal per head, exact)
    el_ref[...] = lax.dot_general(wlt_ref[...], feat, contract_last,
                                  preferred_element_type=jnp.float32)
    # er = feat . W_r        -> [Tn, H]
    er_ref[...] = lax.dot_general(feat, wrt_ref[...], contract_last,
                                  preferred_element_type=jnp.float32)


# ---------------------------------------------------------------------------
# Pass 3: (dst-tile, src-tile) online-softmax attention + aggregation + residual.
# ---------------------------------------------------------------------------
def _attn_kernel(nz_ref, feat_ref, el_ref, er_ref, adj_ref, xd_ref, scale_ref,
                 shift_ref, wres_ref, out_ref, m_sc, l_sc, acc_sc,
                 *, n_heads, out_feats):
    d = pl.program_id(0)
    s = pl.program_id(1)
    n_src_blocks = pl.num_programs(1)
    D = out_feats

    @pl.when(s == 0)
    def _():
        m_sc[...] = jnp.full_like(m_sc, NEG_BIG)         # finite init: no inf-inf NaNs
        l_sc[...] = jnp.zeros_like(l_sc)
        acc_sc[...] = jnp.zeros_like(acc_sc)

    # Skip all-zero adjacency blocks (scalar-prefetched table, SMEM scalar read).
    @pl.when(nz_ref[d * n_src_blocks + s] != 0)
    def _():
        mask = adj_ref[...] != 0                         # [T, S]  adj[dst, src] int8
        feat_s = feat_ref[...]                           # [S, H*D] src features
        el = el_ref[...]                                 # [H, S]   per-src logits
        er = er_ref[...]                                 # [T, H]   per-dst logits
        m_old = m_sc[...]                                # [T, H]
        l_old = l_sc[...]                                # [T, H]
        acc_old = acc_sc[...]                            # [T, H*D]

        m_cols, l_cols, acc_cols = [], [], []
        for h in range(n_heads):                         # small & static -> unrolled
            e = er[:, h:h + 1] + el[h:h + 1, :]          # [T, S]
            e = jnp.where(e > 0, e, NEG_SLOPE * e)       # leaky relu
            e = jnp.where(mask, e, NEG_BIG)              # masked scores (finite)

            m_o = m_old[:, h:h + 1]                      # [T, 1]
            m_n = jnp.maximum(m_o, jnp.max(e, axis=1, keepdims=True))
            alpha = jnp.exp(m_o - m_n)                   # rescale of running stats
            # post-exp mask select is REQUIRED for fully-masked rows (m_n == NEG_BIG).
            p = jnp.where(mask, jnp.exp(e - m_n), 0.0)   # [T, S]

            l_n = alpha * l_old[:, h:h + 1] + jnp.sum(p, axis=1, keepdims=True)
            a_n = alpha * acc_old[:, h * D:(h + 1) * D] + jnp.dot(
                p, feat_s[:, h * D:(h + 1) * D], preferred_element_type=jnp.float32)

            m_cols.append(m_n)
            l_cols.append(l_n)
            acc_cols.append(a_n)

        m_sc[...] = jnp.concatenate(m_cols, axis=1)
        l_sc[...] = jnp.concatenate(l_cols, axis=1)
        acc_sc[...] = jnp.concatenate(acc_cols, axis=1)  # single lane-dense store

    @pl.when(s == pl.num_programs(1) - 1)
    def _():
        # Residual recomputed once per dst tile (same ops as pass 2 -> identical h).
        h_dst = jnp.maximum(xd_ref[...] * scale_ref[...] + shift_ref[...], 0.0)
        res = jnp.dot(h_dst, wres_ref[...], preferred_element_type=jnp.float32)

        l = l_sc[...]                                    # [T, H]
        inv = pl.reciprocal(jnp.maximum(l, 1e-30), approx=False)
        inv = jnp.where(l > 0, inv, 0.0)                 # zero in-degree -> 0
        acc = acc_sc[...]                                # [T, H*D]
        parts = [acc[:, h * D:(h + 1) * D] * inv[:, h:h + 1] for h in range(n_heads)]
        # flatten(1, -1): both heads written with a single lane-dense store.
        out_ref[...] = (jnp.concatenate(parts, axis=1) + res).astype(out_ref.dtype)


# ---------------------------------------------------------------------------
# Wrapper
# ---------------------------------------------------------------------------
def revgat_block(x, adj, params, *, n_heads, out_feats,
                 tile_nodes=512, tile_dst=256, tile_src=256):
    N, C = x.shape
    H, D = n_heads, out_feats
    HD = H * D

    tile_nodes = min(tile_nodes, N)
    tile_dst = min(tile_dst, N)
    tile_src = min(tile_src, N)
    assert N % tile_nodes == 0 and N % tile_dst == 0 and N % tile_src == 0, \
        (N, tile_nodes, tile_dst, tile_src)
    assert (tile_src % 128 == 0) or (tile_src == N), tile_src
    assert (tile_dst % 32 == 0) or (tile_dst == N), tile_dst   # int8 adj sublane tiling

    gamma = params["gamma"]          # [1, C]
    beta = params["beta"]            # [1, C]
    wfc = params["wfc"]              # [C, HD]
    wres = params["wres"]            # [C, HD]
    attn_l = params["attn_l"]        # [H, D]
    attn_r = params["attn_r"]        # [H, D]

    # Block-diagonal per-head attention weights: w_lT[h, h'*D+d] = attn_l[h,d]*[h==h'].
    eye_h = jnp.eye(H, dtype=jnp.float32)
    w_lT = (attn_l[:, None, :] * eye_h[:, :, None]).reshape(H, HD)   # [H, HD]
    w_rT = (attn_r[:, None, :] * eye_h[:, :, None]).reshape(H, HD)   # [H, HD]

    # ---- pass 1: batch statistics -> folded scale/shift --------------------
    pack = 1
    if C <= 128 and 128 % C == 0 and N % (128 // C) == 0:
        pack = 128 // C                                  # lane-dense packed loads
    Np, Cp = N // pack, C * pack
    xp = x.reshape(Np, Cp)                               # row-major contiguous (free)
    tile_p = min(tile_nodes, Np)
    assert Np % tile_p == 0, (Np, tile_p)

    scale, shift = pl.pallas_call(
        functools.partial(_bn_scale_shift_kernel, n_total=N, pack=pack, c=C),
        out_shape=(jax.ShapeDtypeStruct((1, C), jnp.float32),
                   jax.ShapeDtypeStruct((1, C), jnp.float32)),
        grid=(Np // tile_p,),
        in_specs=[pl.BlockSpec((tile_p, Cp), lambda i: (i, 0)),
                  pl.BlockSpec((1, C), lambda i: (0, 0)),
                  pl.BlockSpec((1, C), lambda i: (0, 0))],
        out_specs=(pl.BlockSpec((1, C), lambda i: (0, 0)),
                   pl.BlockSpec((1, C), lambda i: (0, 0))),
        scratch_shapes=[pltpu.VMEM((1, Cp), jnp.float32),
                        pltpu.VMEM((1, Cp), jnp.float32)],
        compiler_params=pltpu.CompilerParams(
            dimension_semantics=("arbitrary",), vmem_limit_bytes=VMEM_LIMIT),
    )(xp, gamma, beta)

    # ---- pass 2: BN + ReLU + projection + hoisted logits --------------------
    feat, el_t, er = pl.pallas_call(
        _project_kernel,
        out_shape=(jax.ShapeDtypeStruct((N, HD), jnp.float32),
                   jax.ShapeDtypeStruct((H, N), jnp.float32),
                   jax.ShapeDtypeStruct((N, H), jnp.float32)),
        grid=(N // tile_nodes,),
        in_specs=[pl.BlockSpec((tile_nodes, C), lambda i: (i, 0)),
                  pl.BlockSpec((1, C), lambda i: (0, 0)),
                  pl.BlockSpec((1, C), lambda i: (0, 0)),
                  pl.BlockSpec((C, HD), lambda i: (0, 0)),
                  pl.BlockSpec((H, HD), lambda i: (0, 0)),
                  pl.BlockSpec((H, HD), lambda i: (0, 0))],
        out_specs=(pl.BlockSpec((tile_nodes, HD), lambda i: (i, 0)),
                   pl.BlockSpec((H, tile_nodes), lambda i: (0, i)),
                   pl.BlockSpec((tile_nodes, H), lambda i: (i, 0))),
        compiler_params=pltpu.CompilerParams(
            dimension_semantics=("parallel",), vmem_limit_bytes=VMEM_LIMIT),
    )(x, scale, shift, wfc, w_lT, w_rT)

    # ---- pass 3: (dst, src)-tiled attention with block skipping -------------
    nd, ns = N // tile_dst, N // tile_src
    # Per-(dst-block, src-block) nonzero table, scalar-prefetched into SMEM (flat 1D).
    blk_sum = adj.astype(jnp.int32).reshape(nd, tile_dst, ns, tile_src).sum(axis=(1, 3))
    block_nz = (blk_sum > 0).astype(jnp.int32).reshape(-1)           # [nd*ns]

    out = pl.pallas_call(
        functools.partial(_attn_kernel, n_heads=H, out_feats=D),
        out_shape=jax.ShapeDtypeStruct((N, HD), jnp.float32),
        grid_spec=pltpu.PrefetchScalarGridSpec(
            num_scalar_prefetch=1,
            grid=(nd, ns),                                            # src = reduction, last
            in_specs=[
                pl.BlockSpec((tile_src, HD), lambda d, s, nz: (s, 0)),    # feat (src tile)
                pl.BlockSpec((H, tile_src), lambda d, s, nz: (0, s)),     # el^T (src tile)
                pl.BlockSpec((tile_dst, H), lambda d, s, nz: (d, 0)),     # er (dst tile)
                pl.BlockSpec((tile_dst, tile_src), lambda d, s, nz: (d, s)),  # adj int8
                pl.BlockSpec((tile_dst, C), lambda d, s, nz: (d, 0)),     # x (dst rows)
                pl.BlockSpec((1, C), lambda d, s, nz: (0, 0)),            # scale
                pl.BlockSpec((1, C), lambda d, s, nz: (0, 0)),            # shift
                pl.BlockSpec((C, HD), lambda d, s, nz: (0, 0)),           # wres
            ],
            out_specs=pl.BlockSpec((tile_dst, HD), lambda d, s, nz: (d, 0)),
            scratch_shapes=[pltpu.VMEM((tile_dst, H), jnp.float32),       # m
                            pltpu.VMEM((tile_dst, H), jnp.float32),       # l
                            pltpu.VMEM((tile_dst, HD), jnp.float32)],     # acc
        ),
        compiler_params=pltpu.CompilerParams(
            dimension_semantics=("parallel", "arbitrary"),
            vmem_limit_bytes=VMEM_LIMIT),
    )(block_nz, feat, el_t, er, adj, x, scale, shift, wres)
    return out


# ---------------------------------------------------------------------------
# Pure-JAX reference with identical semantics.
# ---------------------------------------------------------------------------
def revgat_block_ref(x, adj, params, *, n_heads, out_feats):
    N = x.shape[0]
    mean = x.mean(0, keepdims=True)
    var = ((x - mean) ** 2).mean(0, keepdims=True)
    h = jnp.maximum((x - mean) * lax.rsqrt(var + BN_EPS) * params["gamma"]
                    + params["beta"], 0.0)
    feat = (h @ params["wfc"]).reshape(N, n_heads, out_feats)
    el = (feat * params["attn_l"][None]).sum(-1)              # [N, H]
    er = (feat * params["attn_r"][None]).sum(-1)              # [N, H]
    e = el[None, :, :] + er[:, None, :]                       # [dst, src, H]
    e = jnp.where(e > 0, e, NEG_SLOPE * e)
    mask = (adj != 0)[:, :, None]
    em = jnp.where(mask, e, -jnp.inf)
    emax = jnp.max(em, axis=1, keepdims=True)
    emax = jnp.where(jnp.isfinite(emax), emax, 0.0)
    p = jnp.where(mask, jnp.exp(e - emax), 0.0)
    s = p.sum(1, keepdims=True)
    a = jnp.where(s > 0, p / jnp.where(s > 0, s, 1.0), 0.0)
    rst = jnp.einsum("ijh,jhd->ihd", a, feat)
    res = (h @ params["wres"]).reshape(N, n_heads, out_feats)
    return (rst + res).reshape(N, n_heads * out_feats)


if __name__ == "__main__":
    N = 1024            # 4 dst tiles x 4 src tiles (exercises online softmax + skipping)
    n_heads = 2
    out_feats = 16
    C = n_heads * out_feats      # node_feats == n_heads * out_feats (reversible block)
    HD = n_heads * out_feats

    key = jax.random.PRNGKey(0)
    kx, kadj, kfc, kal, kar, kres, kg, kb = jax.random.split(key, 8)

    x = jax.random.normal(kx, (N, C), dtype=jnp.float32)

    # Banded sparse adjacency with self-loops, adj[dst, src], int8.  The band leaves
    # several (dst-block, src-block) pairs completely empty -> exercises block skipping.
    ii = jnp.arange(N)
    band = jnp.abs(ii[:, None] - ii[None, :]) <= 160
    adj = jnp.logical_and(jax.random.uniform(kadj, (N, N)) < 0.05, band)
    adj = jnp.logical_or(adj, jnp.eye(N, dtype=bool)).astype(jnp.int8)

    gain = jnp.sqrt(2.0)  # calculate_gain('relu')
    std_fc = gain * jnp.sqrt(2.0 / (C + HD))
    params = {
        "gamma": 1.0 + 0.1 * jax.random.normal(kg, (1, C), jnp.float32),
        "beta": 0.1 * jax.random.normal(kb, (1, C), jnp.float32),
        "wfc": std_fc * jax.random.normal(kfc, (C, HD), jnp.float32),
        "attn_l": 0.2 * jax.random.normal(kal, (n_heads, out_feats), jnp.float32),
        "attn_r": 0.2 * jax.random.normal(kar, (n_heads, out_feats), jnp.float32),
        "wres": std_fc * jax.random.normal(kres, (C, HD), jnp.float32),
    }

    out = revgat_block(x, adj, params, n_heads=n_heads, out_feats=out_feats)
    out = jax.block_until_ready(out)

    ref = revgat_block_ref(x, adj, params, n_heads=n_heads, out_feats=out_feats)
    assert out.shape == (N, HD), out.shape
    assert jnp.allclose(out, ref, rtol=1e-4, atol=1e-4), \
        float(jnp.max(jnp.abs(out - ref)))

    print("KERNEL_OK")
</pallas_src>

<mosaic_0001>
module attributes {stable_mosaic.version = 11 : i64} {
  func.func @_bn_scale_shift_kernel(%arg0: i32, %arg1: memref<256x128xf32, #tpu.memory_space<vmem>>, %arg2: memref<1x32xf32, #tpu.memory_space<vmem>>, %arg3: memref<1x32xf32, #tpu.memory_space<vmem>>, %arg4: memref<1x32xf32, #tpu.memory_space<vmem>>, %arg5: memref<1x32xf32, #tpu.memory_space<vmem>>, %arg6: memref<1x128xf32, #tpu.memory_space<vmem>>, %arg7: memref<1x128xf32, #tpu.memory_space<vmem>>) attributes {dimension_semantics = [#tpu.dimension_semantics<arbitrary>], iteration_bounds = array<i64: 1>, scalar_prefetch = 0 : i64, scratch_operands = 2 : i64, tpu.core_type = #tpu.core_type<tc>, window_params = [{transform_indices = @transform_0, window_bounds = array<i64: 256, 128>}, {pipeline_mode = #tpu.pipeline_mode<synchronous>, transform_indices = @transform_1, window_bounds = array<i64: 1, 32>}, {pipeline_mode = #tpu.pipeline_mode<synchronous>, transform_indices = @transform_2, window_bounds = array<i64: 1, 32>}, {pipeline_mode = #tpu.pipeline_mode<synchronous>, transform_indices = @transform_3, window_bounds = array<i64: 1, 32>}, {pipeline_mode = #tpu.pipeline_mode<synchronous>, transform_indices = @transform_4, window_bounds = array<i64: 1, 32>}]} {
    %c0_i32 = arith.constant 0 : i32
    %0 = arith.cmpi eq, %arg0, %c0_i32 : i32
    %1 = arith.extui %0 : i1 to i32
    %c0_i32_0 = arith.constant 0 : i32
    %2 = arith.cmpi ne, %1, %c0_i32_0 : i32
    scf.if %2 {
      %cst_13 = arith.constant 0.000000e+00 : f32
      %18 = vector.broadcast %cst_13 : f32 to vector<1x128xf32>
      %c0_14 = arith.constant 0 : index
      %c0_15 = arith.constant 0 : index
      %19 = vector.load %arg6[%c0_14, %c0_15] : memref<1x128xf32, #tpu.memory_space<vmem>>, vector<1x128xf32>
      tpu.vector_store %arg6[%c0_14, %c0_15], %18 {strides = array<i32>} : memref<1x128xf32, #tpu.memory_space<vmem>>, vector<1x128xf32>,
      %cst_16 = arith.constant 0.000000e+00 : f32
      %20 = vector.broadcast %cst_16 : f32 to vector<1x128xf32>
      %c0_17 = arith.constant 0 : index
      %c0_18 = arith.constant 0 : index
      %21 = vector.load %arg7[%c0_17, %c0_18] : memref<1x128xf32, #tpu.memory_space<vmem>>, vector<1x128xf32>
      tpu.vector_store %arg7[%c0_17, %c0_18], %20 {strides = array<i32>} : memref<1x128xf32, #tpu.memory_space<vmem>>, vector<1x128xf32>,
    } else {
    }
    %c0 = arith.constant 0 : index
    %c0_1 = arith.constant 0 : index
    %3 = vector.load %arg1[%c0, %c0_1] : memref<256x128xf32, #tpu.memory_space<vmem>>, vector<256x128xf32>
    %c0_2 = arith.constant 0 : index
    %c0_3 = arith.constant 0 : index
    %4 = vector.load %arg6[%c0_2, %c0_3] : memref<1x128xf32, #tpu.memory_space<vmem>>, vector<1x128xf32>
    %cst = arith.constant dense<0.000000e+00> : vector<128xf32>
    %5 = vector.multi_reduction <add>, %3, %cst [0] : vector<256x128xf32> to vector<128xf32>
    %6 = vector.shape_cast %5 : vector<128xf32> to vector<1x128xf32>
    %7 = arith.addf %4, %6 : vector<1x128xf32>
    %c0_4 = arith.constant 0 : index
    %c0_5 = arith.constant 0 : index
    %8 = vector.load %arg6[%c0_4, %c0_5] : memref<1x128xf32, #tpu.memory_space<vmem>>, vector<1x128xf32>
    tpu.vector_store %arg6[%c0_4, %c0_5], %7 {strides = array<i32>} : memref<1x128xf32, #tpu.memory_space<vmem>>, vector<1x128xf32>,
    %c0_6 = arith.constant 0 : index
    %c0_7 = arith.constant 0 : index
    %9 = vector.load %arg7[%c0_6, %c0_7] : memref<1x128xf32, #tpu.memory_space<vmem>>, vector<1x128xf32>
    %10 = arith.mulf %3, %3 : vector<256x128xf32>
    %cst_8 = arith.constant dense<0.000000e+00> : vector<128xf32>
    %11 = vector.multi_reduction <add>, %10, %cst_8 [0] : vector<256x128xf32> to vector<128xf32>
    %12 = vector.shape_cast %11 : vector<128xf32> to vector<1x128xf32>
    %13 = arith.addf %9, %12 : vector<1x128xf32>
    %c0_9 = arith.constant 0 : index
    %c0_10 = arith.constant 0 : index
    %14 = vector.load %arg7[%c0_9, %c0_10] : memref<1x128xf32, #tpu.memory_space<vmem>>, vector<1x128xf32>
    tpu.vector_store %arg7[%c0_9, %c0_10], %13 {strides = array<i32>} : memref<1x128xf32, #tpu.memory_space<vmem>>, vector<1x128xf32>,
    %c0_i32_11 = arith.constant 0 : i32
    %15 = arith.cmpi eq, %arg0, %c0_i32_11 : i32
    %16 = arith.extui %15 : i1 to i32
    %c0_i32_12 = arith.constant 0 : i32
    %17 = arith.cmpi ne, %16, %c0_i32_12 : i32
    scf.if %17 {
      %c0_13 = arith.constant 0 : index
      %c0_14 = arith.constant 0 : index
      %18 = vector.load %arg6[%c0_13, %c0_14] : memref<1x128xf32, #tpu.memory_space<vmem>>, vector<1x128xf32>
      %c0_15 = arith.constant 0 : index
      %c0_16 = arith.constant 0 : index
      %19 = vector.load %arg7[%c0_15, %c0_16] : memref<1x128xf32, #tpu.memory_space<vmem>>, vector<1x128xf32>
      %20 = vector.extract_strided_slice %18 {offsets = [0, 0], sizes = [1, 32], strides = [1, 1]} : vector<1x128xf32> to vector<1x32xf32>
      %21 = vector.extract_strided_slice %19 {offsets = [0, 0], sizes = [1, 32], strides = [1, 1]} : vector<1x128xf32> to vector<1x32xf32>
      %22 = vector.extract_strided_slice %18 {offsets = [0, 32], sizes = [1, 32], strides = [1, 1]} : vector<1x128xf32> to vector<1x32xf32>
      %23 = arith.addf %20, %22 : vector<1x32xf32>
      %24 = vector.extract_strided_slice %19 {offsets = [0, 32], sizes = [1, 32], strides = [1, 1]} : vector<1x128xf32> to vector<1x32xf32>
      %25 = arith.addf %21, %24 : vector<1x32xf32>
      %26 = vector.extract_strided_slice %18 {offsets = [0, 64], sizes = [1, 32], strides = [1, 1]} : vector<1x128xf32> to vector<1x32xf32>
      %27 = arith.addf %23, %26 : vector<1x32xf32>
      %28 = vector.extract_strided_slice %19 {offsets = [0, 64], sizes = [1, 32], strides = [1, 1]} : vector<1x128xf32> to vector<1x32xf32>
      %29 = arith.addf %25, %28 : vector<1x32xf32>
      %30 = vector.extract_strided_slice %18 {offsets = [0, 96], sizes = [1, 32], strides = [1, 1]} : vector<1x128xf32> to vector<1x32xf32>
      %31 = arith.addf %27, %30 : vector<1x32xf32>
      %32 = vector.extract_strided_slice %19 {offsets = [0, 96], sizes = [1, 32], strides = [1, 1]} : vector<1x128xf32> to vector<1x32xf32>
      %33 = arith.addf %29, %32 : vector<1x32xf32>
      %cst_17 = arith.constant 9.765625E-4 : f32
      %34 = vector.broadcast %cst_17 : f32 to vector<1x32xf32>
      %35 = arith.mulf %31, %34 : vector<1x32xf32>
      %cst_18 = arith.constant 9.765625E-4 : f32
      %36 = vector.broadcast %cst_18 : f32 to vector<1x32xf32>
      %37 = arith.mulf %33, %36 : vector<1x32xf32>
      %38 = arith.mulf %35, %35 : vector<1x32xf32>
      %39 = arith.subf %37, %38 : vector<1x32xf32>
      %cst_19 = arith.constant 9.99999974E-6 : f32
      %40 = vector.broadcast %cst_19 : f32 to vector<1x32xf32>
      %41 = arith.addf %39, %40 : vector<1x32xf32>
      %42 = math.rsqrt %41 : vector<1x32xf32>
      %c0_20 = arith.constant 0 : index
      %c0_21 = arith.constant 0 : index
      %43 = vector.load %arg2[%c0_20, %c0_21] : memref<1x32xf32, #tpu.memory_space<vmem>>, vector<1x32xf32>
      %44 = arith.mulf %42, %43 : vector<1x32xf32>
      %c0_22 = arith.constant 0 : index
      %c0_23 = arith.constant 0 : index
      %45 = vector.load %arg4[%c0_22, %c0_23] : memref<1x32xf32, #tpu.memory_space<vmem>>, vector<1x32xf32>
      tpu.vector_store %arg4[%c0_22, %c0_23], %44 {strides = array<i32>} : memref<1x32xf32, #tpu.memory_space<vmem>>, vector<1x32xf32>,
      %c0_24 = arith.constant 0 : index
      %c0_25 = arith.constant 0 : index
      %46 = vector.load %arg3[%c0_24, %c0_25] : memref<1x32xf32, #tpu.memory_space<vmem>>, vector<1x32xf32>
      %47 = arith.mulf %35, %44 : vector<1x32xf32>
      %48 = arith.subf %46, %47 : vector<1x32xf32>
      %c0_26 = arith.constant 0 : index
      %c0_27 = arith.constant 0 : index
      %49 = vector.load %arg5[%c0_26, %c0_27] : memref<1x32xf32, #tpu.memory_space<vmem>>, vector<1x32xf32>
      tpu.vector_store %arg5[%c0_26, %c0_27], %48 {strides = array<i32>} : memref<1x32xf32, #tpu.memory_space<vmem>>, vector<1x32xf32>,
    } else {
    }
    return
  }
  func.func @transform_0(%arg0: i32) -> (i32, i32) {
    %c0_i32 = arith.constant 0 : i32
    %c0_i32_0 = arith.constant 0 : i32
    return %arg0, %c0_i32 : i32, i32
  }
  func.func @transform_1(%arg0: i32) -> (i32, i32) {
    %c0_i32 = arith.constant 0 : i32
    %c0_i32_0 = arith.constant 0 : i32
    %c0_i32_1 = arith.constant 0 : i32
    return %c0_i32, %c0_i32_0 : i32, i32
  }
  func.func @transform_2(%arg0: i32) -> (i32, i32) {
    %c0_i32 = arith.constant 0 : i32
    %c0_i32_0 = arith.constant 0 : i32
    %c0_i32_1 = arith.constant 0 : i32
    return %c0_i32, %c0_i32_0 : i32, i32
  }
  func.func @transform_3(%arg0: i32) -> (i32, i32) {
    %c0_i32 = arith.constant 0 : i32
    %c0_i32_0 = arith.constant 0 : i32
    %c0_i32_1 = arith.constant 0 : i32
    return %c0_i32, %c0_i32_0 : i32, i32
  }
  func.func @transform_4(%arg0: i32) -> (i32, i32) {
    %c0_i32 = arith.constant 0 : i32
    %c0_i32_0 = arith.constant 0 : i32
    %c0_i32_1 = arith.constant 0 : i32
    return %c0_i32, %c0_i32_0 : i32, i32
  }
}

</mosaic_0001>

<llo_original>
// kernel: tpu_custom_call.1
$region0: #{tpu_custom_call.1}
  #allocation0 [shape = 'u32[]', space=smem, size = 0x4, offset = 0x4, fixed_abs, tag = 'smem constant byte address 0x4 - core index']
  #allocation1 [shape = 'u32[144,128]{1,0:T(1,128)}', space=vmem, size = 0x12000, scoped, tag = 'internal scratch']
  #allocation2 [shape = 'f32[1,128]{1,0:T(1,128)}', space=vmem, size = 0x200, scoped, tag = 'scratch operand']
  #allocation3 [shape = 'f32[1,128]{1,0:T(1,128)}', space=vmem, size = 0x200, scoped, tag = 'scratch operand']
  %s0 = inlined_call_operand.hbm [shape: f32[256,128], index: 0, kind: input, shape index: {}]
  %s1 = inlined_call_operand.vmem [shape: f32[1,32], index: 1, kind: input, shape index: {}]
  %s2 = inlined_call_operand.vmem [shape: f32[1,32], index: 2, kind: input, shape index: {}]
  %s3 = inlined_call_operand.hbm [shape: f32[1,32], index: 3, kind: output, shape index: {0}]
  %s4 = inlined_call_operand.hbm [shape: f32[1,32], index: 4, kind: output, shape index: {1}]
  %5 = xla_tuple %s3, %s4
  %s6 = sld [smem:[#allocation0]]
  $region42: #{tpu_custom_call.1} parent=0
    _
  %s8 = ssub.s32 1, %s6
  %s9 = scalar_select 0, %s8, %s6
  $region1: #{tpu_custom_call.1} parent=0
    #allocation4 [shape = 'u8[131072]{0}', space=vmem, size = 0x20000, scoped, tag = 'input window, operand 0, single buffered']
    #allocation5 [shape = 's32[1]{0}', space=sflag, size = 0x4, scoped, tag = 'scoped memory for tpu_custom_call.1']
    #allocation6 [shape = 's32[1]{0}', space=sflag, size = 0x4, scoped, tag = 'scoped memory for tpu_custom_call.1']
    #allocation7 [shape = 'u8[512]{0}', space=vmem, size = 0x400, scoped, tag = 'output window, operand 0, single buffered']
    #allocation8 [shape = 'u8[512]{0}', space=vmem, size = 0x400, scoped, tag = 'output window, operand 1, single buffered']
    #allocation9 [shape = 's32[1]{0}', space=sflag, size = 0x4, scoped, tag = 'scoped memory for tpu_custom_call.1']
    %10 = vsyncpa [#allocation5], 0
    %11 = vsyncpa [#allocation6], 0
    %12 = vsyncpa [#allocation9], 0
    // Predicated region
    $region2: #{tpu_custom_call.1} parent=1 // pred_check
      _
    $region3: #{tpu_custom_call.1} parent=1 // pred_check_branch
      %14 = sbr.rel (0) target = $region5
    $region4: #{tpu_custom_call.1} parent=1 // pred_region
      %s16 = ssub.s32 4096, 4096
      %17 = vsyncadd [#allocation5], %s16
      %s18 = sshll.u32 [#allocation4], 4
      %s19 = int_to_ptr.vmem [resolvable:$true] %s18
      %24 = dma.hbm_to_vmem [thread:$0]  %s0, 4096, %s19, [#allocation5], 128, 128, 8
    $region5: #{tpu_custom_call.1} parent=1 // pred_fallthru
      _
    // Predicated region
    $region6: #{tpu_custom_call.1} parent=1 // pred_check
      _
    $region7: #{tpu_custom_call.1} parent=1 // pred_check_branch
      %26 = sbr.rel (0) target = $region9
    $region8: #{tpu_custom_call.1} parent=1 // pred_region
      _
    $region9: #{tpu_custom_call.1} parent=1 // pred_fallthru
      _
    // Predicated region
    $region10: #{tpu_custom_call.1} parent=1 // pred_check
      _
    $region11: #{tpu_custom_call.1} parent=1 // pred_check_branch
      %28 = sbr.rel (0) target = $region13
    $region12: #{tpu_custom_call.1} parent=1 // pred_region
      _
    $region13: #{tpu_custom_call.1} parent=1 // pred_fallthru
      _
    // Predicated region
    $region14: #{tpu_custom_call.1} parent=1 // pred_check
      _
    $region15: #{tpu_custom_call.1} parent=1 // pred_check_branch
      %30 = sbr.rel (0) target = $region17
    $region16: #{tpu_custom_call.1} parent=1 // pred_region
      %31 = dma.done [#allocation5], 4096
    $region17: #{tpu_custom_call.1} parent=1 // pred_fallthru
      _
    %p32 = scmp.eq.s32.totalorder 0, 0
    // Predicated region
    $region18: #{tpu_custom_call.1} parent=1 // pred_check
      %p33 = pneg %p32
    $region19: #{tpu_custom_call.1} parent=1 // pred_check_branch
      %35 = sbr.rel (%p33) target = $region21
    $region20: #{tpu_custom_call.1} parent=1 // pred_region
      %36 = vst [vmem:[#allocation2] sm:$0x1] 0.0
      %37 = vst [vmem:[#allocation3] sm:$0x1] 0.0
    $region21: #{tpu_custom_call.1} parent=1 // pred_fallthru
      _
    %v38 = vld [vmem:[#allocation4] sm:$0xff]
    %v39 = vld [vmem:[#allocation4 + $0x8] sm:$0xff]
    %v40 = vld [vmem:[#allocation4 + $0x10] sm:$0xff]
    %v41 = vld [vmem:[#allocation4 + $0x18] sm:$0xff]
    %v42 = vld [vmem:[#allocation4 + $0x20] sm:$0xff]
    %v43 = vld [vmem:[#allocation4 + $0x28] sm:$0xff]
    %v44 = vld [vmem:[#allocation4 + $0x30] sm:$0xff]
    %v45 = vld [vmem:[#allocation4 + $0x38] sm:$0xff]
    %v46 = vld [vmem:[#allocation4 + $0x40] sm:$0xff]
    %v47 = vld [vmem:[#allocation4 + $0x48] sm:$0xff]
    %v48 = vld [vmem:[#allocation4 + $0x50] sm:$0xff]
    %v49 = vld [vmem:[#allocation4 + $0x58] sm:$0xff]
    %v50 = vld [vmem:[#allocation4 + $0x60] sm:$0xff]
    %v51 = vld [vmem:[#allocation4 + $0x68] sm:$0xff]
    %v52 = vld [vmem:[#allocation4 + $0x70] sm:$0xff]
    %v53 = vld [vmem:[#allocation4 + $0x78] sm:$0xff]
    %v54 = vld [vmem:[#allocation4 + $0x80] sm:$0xff]
    %v55 = vld [vmem:[#allocation4 + $0x88] sm:$0xff]
    %v56 = vld [vmem:[#allocation4 + $0x90] sm:$0xff]
    %v57 = vld [vmem:[#allocation4 + $0x98] sm:$0xff]
    %v58 = vld [vmem:[#allocation4 + $0xa0] sm:$0xff]
    %v59 = vld [vmem:[#allocation4 + $0xa8] sm:$0xff]
    %v60 = vld [vmem:[#allocation4 + $0xb0] sm:$0xff]
    %v61 = vld [vmem:[#allocation4 + $0xb8] sm:$0xff]
    %v62 = vld [vmem:[#allocation4 + $0xc0] sm:$0xff]
    %v63 = vld [vmem:[#allocation4 + $0xc8] sm:$0xff]
    %v64 = vld [vmem:[#allocation4 + $0xd0] sm:$0xff]
    %v65 = vld [vmem:[#allocation4 + $0xd8] sm:$0xff]
    %v66 = vld [vmem:[#allocation4 + $0xe0] sm:$0xff]
    %v67 = vld [vmem:[#allocation4 + $0xe8] sm:$0xff]
    %v68 = vld [vmem:[#allocation4 + $0xf0] sm:$0xff]
    %v69 = vld [vmem:[#allocation4 + $0xf8] sm:$0xff]
    %v70 = vld [vmem:[#allocation2] sm:$0x1]
    %v71 = vadd.f32 %v38, %v39
    %v72 = vadd.f32 %v71, %v40
    %v73 = vadd.f32 %v72, %v41
    %v74 = vadd.f32 %v73, %v42
    %v75 = vadd.f32 %v74, %v43
    %v76 = vadd.f32 %v75, %v44
    %v77 = vadd.f32 %v76, %v45
    %v78 = vadd.f32 %v77, %v46
    %v79 = vadd.f32 %v78, %v47
    %v80 = vadd.f32 %v79, %v48
    %v81 = vadd.f32 %v80, %v49
    %v82 = vadd.f32 %v81, %v50
    %v83 = vadd.f32 %v82, %v51
    %v84 = vadd.f32 %v83, %v52
    %v85 = vadd.f32 %v84, %v53
    %v86 = vadd.f32 %v85, %v54
    %v87 = vadd.f32 %v86, %v55
    %v88 = vadd.f32 %v87, %v56
    %v89 = vadd.f32 %v88, %v57
    %v90 = vadd.f32 %v89, %v58
    %v91 = vadd.f32 %v90, %v59
    %v92 = vadd.f32 %v91, %v60
    %v93 = vadd.f32 %v92, %v61
    %v94 = vadd.f32 %v93, %v62
    %v95 = vadd.f32 %v94, %v63
    %v96 = vadd.f32 %v95, %v64
    %v97 = vadd.f32 %v96, %v65
    %v98 = vadd.f32 %v97, %v66
    %v99 = vadd.f32 %v98, %v67
    %v100 = vadd.f32 %v99, %v68
    %v101 = vadd.f32 %v100, %v69
    %v102 = vrot.slane %v101, 4
    %v103 = vadd.f32 %v101, %v102
    %v104 = vrot.slane %v103, 2
    %v105 = vadd.f32 %v103, %v104
    %v106 = vrot.slane %v105, 1
    %v107 = vadd.f32 %v105, %v106
    %v108 = vadd.f32 %v70, %v107
    %109 = vst [vmem:[#allocation2] sm:$0x1] %v108
    %v110 = vld [vmem:[#allocation3] sm:$0x1]
    %v111 = vmul.f32 %v38, %v38
    %v112 = vmul.f32 %v39, %v39
    %v113 = vmul.f32 %v40, %v40
    %v114 = vmul.f32 %v41, %v41
    %v115 = vmul.f32 %v42, %v42
    %v116 = vmul.f32 %v43, %v43
    %v117 = vmul.f32 %v44, %v44
    %v118 = vmul.f32 %v45, %v45
    %v119 = vmul.f32 %v46, %v46
    %v120 = vmul.f32 %v47, %v47
    %v121 = vmul.f32 %v48, %v48
    %v122 = vmul.f32 %v49, %v49
    %v123 = vmul.f32 %v50, %v50
    %v124 = vmul.f32 %v51, %v51
    %v125 = vmul.f32 %v52, %v52
    %v126 = vmul.f32 %v53, %v53
    %v127 = vmul.f32 %v54, %v54
    %v128 = vmul.f32 %v55, %v55
    %v129 = vmul.f32 %v56, %v56
    %v130 = vmul.f32 %v57, %v57
    %v131 = vmul.f32 %v58, %v58
    %v132 = vmul.f32 %v59, %v59
    %v133 = vmul.f32 %v60, %v60
    %v134 = vmul.f32 %v61, %v61
    %v135 = vmul.f32 %v62, %v62
    %v136 = vmul.f32 %v63, %v63
    %v137 = vmul.f32 %v64, %v64
    %v138 = vmul.f32 %v65, %v65
    %v139 = vmul.f32 %v66, %v66
    %v140 = vmul.f32 %v67, %v67
    %v141 = vmul.f32 %v68, %v68
    %v142 = vmul.f32 %v69, %v69
    %v143 = vadd.f32 %v111, %v112
    %v144 = vadd.f32 %v143, %v113
    %v145 = vadd.f32 %v144, %v114
    %v146 = vadd.f32 %v145, %v115
    %v147 = vadd.f32 %v146, %v116
    %v148 = vadd.f32 %v147, %v117
    %v149 = vadd.f32 %v148, %v118
    %v150 = vadd.f32 %v149, %v119
    %v151 = vadd.f32 %v150, %v120
    %v152 = vadd.f32 %v151, %v121
    %v153 = vadd.f32 %v152, %v122
    %v154 = vadd.f32 %v153, %v123
    %v155 = vadd.f32 %v154, %v124
    %v156 = vadd.f32 %v155, %v125
    %v157 = vadd.f32 %v156, %v126
    %v158 = vadd.f32 %v157, %v127
    %v159 = vadd.f32 %v158, %v128
    %v160 = vadd.f32 %v159, %v129
    %v161 = vadd.f32 %v160, %v130
    %v162 = vadd.f32 %v161, %v131
    %v163 = vadd.f32 %v162, %v132
    %v164 = vadd.f32 %v163, %v133
    %v165 = vadd.f32 %v164, %v134
    %v166 = vadd.f32 %v165, %v135
    %v167 = vadd.f32 %v166, %v136
    %v168 = vadd.f32 %v167, %v137
    %v169 = vadd.f32 %v168, %v138
    %v170 = vadd.f32 %v169, %v139
    %v171 = vadd.f32 %v170, %v140
    %v172 = vadd.f32 %v171, %v141
    %v173 = vadd.f32 %v172, %v142
    %v174 = vrot.slane %v173, 4
    %v175 = vadd.f32 %v173, %v174
    %v176 = vrot.slane %v175, 2
    %v177 = vadd.f32 %v175, %v176
    %v178 = vrot.slane %v177, 1
    %v179 = vadd.f32 %v177, %v178
    %v180 = vadd.f32 %v110, %v179
    %181 = vst [vmem:[#allocation3] sm:$0x1] %v180
    // Predicated region
    $region22: #{tpu_custom_call.1} parent=1 // pred_check
      %p182 = pneg %p32
    $region23: #{tpu_custom_call.1} parent=1 // pred_check_branch
      %184 = sbr.rel (%p182) target = $region25
    $region24: #{tpu_custom_call.1} parent=1 // pred_region
      %v185 = vld [vmem:[#allocation2] sm:$0x1]
      %v186 = vld [vmem:[#allocation3] sm:$0x1]
      %188 = vrot.lane.b32.xlu0 %v185, 96
      %v189 = vpop.permute.xlu0 %188
      %v191 = vadd.f32 %v185, %v189
      %193 = vrot.lane.b32.xlu0 %v186, 96
      %v194 = vpop.permute.xlu0 %193
      %v196 = vadd.f32 %v186, %v194
      %197 = vrot.lane.b32.xlu0 %v185, 64
      %v198 = vpop.permute.xlu0 %197
      %v200 = vadd.f32 %v191, %v198
      %201 = vrot.lane.b32.xlu0 %v186, 64
      %v202 = vpop.permute.xlu0 %201
      %v204 = vadd.f32 %v196, %v202
      %205 = vrot.lane.b32.xlu0 %v185, 32
      %v206 = vpop.permute.xlu0 %205
      %v208 = vadd.f32 %v200, %v206
      %209 = vrot.lane.b32.xlu0 %v186, 32
      %v210 = vpop.permute.xlu0 %209
      %v212 = vadd.f32 %v204, %v210
      %v213 = vmul.f32 %v208, 0.0009765625
      %v214 = vmul.f32 %v212, 0.0009765625
      %v215 = vmul.f32 %v213, %v213
      %v216 = vsub.f32 %v214, %v215
      %v217 = vadd.f32 %v216, 1e-05
      %v218 = vrsqrt.pop %v217
      %v219 = vld [vmem:[%s1] sm:$0x1]
      %v220 = vmul.f32 %v218, %v219
      %vm221 = vcmask 253952
      %222 = vst.msk [vmem:[#allocation7] sm:$0x1] %vm221, %v220
      %v223 = vld [vmem:[%s2] sm:$0x1]
      %v224 = vmul.f32 %v213, %v220
      %v225 = vsub.f32 %v223, %v224
      %226 = vst.msk [vmem:[#allocation8] sm:$0x1] %vm221, %v225
    $region25: #{tpu_custom_call.1} parent=1 // pred_fallthru
      _
    // Predicated region
    $region26: #{tpu_custom_call.1} parent=1 // pred_check
      _
    $region27: #{tpu_custom_call.1} parent=1 // pred_check_branch
      %228 = sbr.rel (0) target = $region29
    $region28: #{tpu_custom_call.1} parent=1 // pred_region
      %s230 = ssub.s32 16, 16
      %231 = vsyncadd [#allocation6], %s230
      %s233 = sshll.u32 [#allocation7], 4
      %s234 = int_to_ptr.vmem [resolvable:$true] %s233
      %236 = dma.vmem_to_hbm [thread:$0]  %s234, 16, %s3, [#allocation6]
    $region29: #{tpu_custom_call.1} parent=1 // pred_fallthru
      _
    // Predicated region
    $region30: #{tpu_custom_call.1} parent=1 // pred_check
      _
    $region31: #{tpu_custom_call.1} parent=1 // pred_check_branch
      %238 = sbr.rel (0) target = $region33
    $region32: #{tpu_custom_call.1} parent=1 // pred_region
      %s240 = ssub.s32 16, 16
      %241 = vsyncadd [#allocation9], %s240
      %s243 = sshll.u32 [#allocation8], 4
      %s244 = int_to_ptr.vmem [resolvable:$true] %s243
      %246 = dma.vmem_to_hbm [thread:$0]  %s244, 16, %s4, [#allocation9]
    $region33: #{tpu_custom_call.1} parent=1 // pred_fallthru
      _
    // Predicated region
    $region34: #{tpu_custom_call.1} parent=1 // pred_check
      _
    $region35: #{tpu_custom_call.1} parent=1 // pred_check_branch
      %248 = sbr.rel (0) target = $region37
    $region36: #{tpu_custom_call.1} parent=1 // pred_region
      %249 = dma.done [#allocation6], 16
    $region37: #{tpu_custom_call.1} parent=1 // pred_fallthru
      _
    // Predicated region
    $region38: #{tpu_custom_call.1} parent=1 // pred_check
      _
    $region39: #{tpu_custom_call.1} parent=1 // pred_check_branch
      %251 = sbr.rel (0) target = $region41
    $region40: #{tpu_custom_call.1} parent=1 // pred_region
      %252 = dma.done [#allocation9], 16
    $region41: #{tpu_custom_call.1} parent=1 // pred_fallthru
      _
    %253 = vsyncpa [#allocation5], 1
    %254 = vsyncpa [#allocation6], 1
    %255 = vsyncpa [#allocation9], 1

</llo_original>
